<compile_context>
chip_gen: v5e
topology: v5e:2x2
jax: 0.10.0
libtpu: 0.0.40
codegen_flags: <defaults>
</compile_context>

<pallas_src>
import jax
import jax.numpy as jnp
from jax.experimental import pallas as pl
from jax.experimental.pallas import tpu as pltpu


def _make_mask_kernel(col_tile):
    """Kernel factory.  col_tile=None -> plain compare over the full strip;
    col_tile=int -> band-only compute with constant splats elsewhere."""

    def kernel(col_ref, o_ref):
        i = pl.program_id(0)
        tm, n = o_ref.shape
        r0 = i * tm
        # (tm, 1) row ids; column ids come from the tiny resident input.
        row_ids = jax.lax.broadcasted_iota(jnp.int32, (tm, 1), 0) + r0

        if col_tile is None:
            # Whole-strip compare: (1, n) int32 broadcast against (tm, 1).
            o_ref[...] = col_ref[...] > row_ids
            return

        ct = col_tile
        n_full = n // ct
        # Hoist constant splats out of the loop (broadcasts are not CSE'd).
        false_blk = jnp.zeros((tm, ct), dtype=jnp.bool_)
        true_blk = jnp.ones((tm, ct), dtype=jnp.bool_)

        for c in range(n_full):  # static unroll; bounded to <= 64 tiles
            c0 = c * ct
            all_false = (c0 + ct - 1) <= r0       # every col <= smallest row
            all_true = c0 >= r0 + tm              # every col >  largest row

            @pl.when(all_false)
            def _(c0=c0):
                o_ref[:, c0:c0 + ct] = false_blk

            @pl.when(all_true)
            def _(c0=c0):
                o_ref[:, c0:c0 + ct] = true_blk

            @pl.when(jnp.logical_not(jnp.logical_or(all_false, all_true)))
            def _(c0=c0):
                o_ref[:, c0:c0 + ct] = col_ref[:, c0:c0 + ct] > row_ids

        tail = n - n_full * ct
        if tail > 0:
            c0 = n_full * ct
            o_ref[:, c0:c0 + tail] = col_ref[:, c0:c0 + tail] > row_ids

    return kernel


def _vmem_config():
    """(double-buffered-strip budget, vmem_limit_bytes), generation-aware."""
    cap = 64 << 20  # conservative fallback (v7x-sized VMEM)
    try:
        info = pltpu.get_tpu_info()
        cap = int(getattr(info, "vmem_capacity_bytes", cap))
    except Exception:
        pass
    limit = min(cap // 2, 64 << 20)          # 64 MiB on v5e/v6e, 32 MiB on v7x
    budget = min(24 << 20, (limit * 3) // 4)  # leave headroom for temporaries
    return budget, limit


def self_attention_mask(size: int, *, max_row_tile: int = 512,
                        vmem_budget_bytes: int | None = None,
                        vmem_limit_bytes: int | None = None) -> jax.Array:
    """Pallas equivalent of SelfAttentionMask.forward(size)."""
    if size <= 0:
        raise ValueError("size must be positive")

    budget, limit = _vmem_config()
    if vmem_budget_bytes is not None:
        budget = vmem_budget_bytes
    if vmem_limit_bytes is not None:
        limit = vmem_limit_bytes

    # Row tile: multiple of 32 (bool packs (32,128) per vreg); halve while the
    # double-buffered output strip exceeds the budget, re-snapping to 32 each
    # time so non-power-of-two max_row_tile can never yield an illegal block.
    row_tile = max(32, (max_row_tile // 32) * 32)
    while row_tile > 32 and 2 * row_tile * size > budget:
        row_tile = max(32, ((row_tile // 2) // 32) * 32)

    if size <= min(256, row_tile):
        # Small mask: single full-extent block (legal for any size).
        row_tile = size
        grid = (1,)
    else:
        # >= 2 grid steps so v7x's two TensorCores both get rows; cdiv grid,
        # Pallas clips the partial last block.
        half = (((size + 1) // 2) + 31) // 32 * 32
        row_tile = min(row_tile, half)
        grid = (pl.cdiv(size, row_tile),)

    # Band-only compute for large masks; keep the static unroll bounded.
    col_tile = None
    if size >= 2048:
        col_tile = 512
        while size // col_tile > 64:
            col_tile *= 2

    # Tiny resident column-id input (fetched once, reused every grid step).
    col_ids = jnp.arange(size, dtype=jnp.int32).reshape(1, size)

    return pl.pallas_call(
        _make_mask_kernel(col_tile),
        out_shape=jax.ShapeDtypeStruct((size, size), jnp.bool_),
        grid_spec=pltpu.PrefetchScalarGridSpec(
            num_scalar_prefetch=0,
            grid=grid,
            in_specs=[pl.BlockSpec((1, size), lambda i: (0, 0))],
            out_specs=pl.BlockSpec((row_tile, size), lambda i: (i, 0)),
        ),
        compiler_params=pltpu.CompilerParams(
            dimension_semantics=("parallel",),
            vmem_limit_bytes=limit,
        ),
    )(col_ids)


def _reference_mask(size: int) -> jax.Array:
    rows = jnp.arange(size)[:, None]
    cols = jnp.arange(size)[None, :]
    return cols > rows


if __name__ == "__main__":
    # No tensor inputs are needed (forward takes only an int `size`), but we
    # build a deterministic dummy activation to mirror a typical call site
    # where the mask size comes from a sequence length.
    key = jax.random.PRNGKey(0)
    seq = 16
    x = jax.random.normal(key, (2, seq, 32), dtype=jnp.float32)  # (B, S, H)
    size = x.shape[1]

    # Small size: single-block, plain-compare path.
    mask = jax.block_until_ready(self_attention_mask(size))
    assert mask.shape == (size, size)
    assert mask.dtype == jnp.bool_
    assert bool(jnp.all(mask == _reference_mask(size)))

    # Multi-step cdiv grid + partial last row block (size not a multiple of 32).
    odd = 100
    mask_odd = jax.block_until_ready(self_attention_mask(odd, max_row_tile=32))
    assert mask_odd.shape == (odd, odd)
    assert bool(jnp.all(mask_odd == _reference_mask(odd)))

    # Banded path: all-False / all-True splats + band compare + column tail
    # (2100 = 4 full 512-wide tiles + 52-col tail) + partial last row block.
    big = 2100
    mask_big = jax.block_until_ready(self_attention_mask(big))
    assert mask_big.shape == (big, big)
    assert bool(jnp.all(mask_big == _reference_mask(big)))

    print("KERNEL_OK")
</pallas_src>

<mosaic_0001>
module attributes {stable_mosaic.version = 11 : i64} {
  func.func @kernel(%arg0: i32, %arg1: memref<1x16xi32, #tpu.memory_space<vmem>>, %arg2: memref<16x16xi32, #tpu.memory_space<vmem>>) attributes {dimension_semantics = [#tpu.dimension_semantics<parallel>], iteration_bounds = array<i64: 1>, scalar_prefetch = 0 : i64, scratch_operands = 0 : i64, tpu.core_type = #tpu.core_type<tc>, window_params = [{pipeline_mode = #tpu.pipeline_mode<synchronous>, transform_indices = @transform_0, window_bounds = array<i64: 1, 16>}, {transform_indices = @transform_1, window_bounds = array<i64: 16, 16>}]} {
    %c16_i32 = arith.constant 16 : i32
    %0 = arith.muli %arg0, %c16_i32 : i32
    %1 = tpu.iota {dimensions = array<i32: 0>} : vector<16x1xi32>
    %2 = vector.broadcast %0 : i32 to vector<16x1xi32>
    %3 = arith.addi %1, %2 : vector<16x1xi32>
    %c0 = arith.constant 0 : index
    %c0_0 = arith.constant 0 : index
    %4 = vector.load %arg1[%c0, %c0_0] : memref<1x16xi32, #tpu.memory_space<vmem>>, vector<1x16xi32>
    %5 = vector.broadcast %4 : vector<1x16xi32> to vector<16x16xi32>
    %6 = vector.broadcast %3 : vector<16x1xi32> to vector<16x16xi32>
    %7 = arith.cmpi sgt, %5, %6 : vector<16x16xi32>
    %c0_1 = arith.constant 0 : index
    %c0_2 = arith.constant 0 : index
    %8 = vector.load %arg2[%c0_1, %c0_2] : memref<16x16xi32, #tpu.memory_space<vmem>>, vector<16x16xi32>
    %9 = arith.extui %7 : vector<16x16xi1> to vector<16x16xi32>
    %cst = arith.constant dense<0> : vector<16x16xi32>
    %10 = arith.cmpi ne, %8, %cst : vector<16x16xi32>
    tpu.vector_store %arg2[%c0_1, %c0_2], %9 {strides = array<i32>} : memref<16x16xi32, #tpu.memory_space<vmem>>, vector<16x16xi32>,
    return
  }
  func.func @transform_0(%arg0: i32) -> (i32, i32) {
    %c0_i32 = arith.constant 0 : i32
    %c0_i32_0 = arith.constant 0 : i32
    %c0_i32_1 = arith.constant 0 : i32
    return %c0_i32, %c0_i32_0 : i32, i32
  }
  func.func @transform_1(%arg0: i32) -> (i32, i32) {
    %c0_i32 = arith.constant 0 : i32
    %c0_i32_0 = arith.constant 0 : i32
    return %arg0, %c0_i32 : i32, i32
  }
}

</mosaic_0001>

<llo_original>
// kernel: tpu_custom_call.1
$region0: #{tpu_custom_call.1}
  #allocation0 [shape = 'u32[]', space=smem, size = 0x4, offset = 0x4, fixed_abs, tag = 'smem constant byte address 0x4 - core index']
  #allocation1 [shape = 'u32[72,128]{1,0:T(1,128)}', space=vmem, size = 0x9000, scoped, tag = 'internal scratch']
  %s0 = inlined_call_operand.hbm [shape: s32[1,16], index: 0, kind: input, shape index: {}]
  %s1 = inlined_call_operand.vmem [shape: s32[16,16], index: 1, kind: output, shape index: {}]
  %s2 = sld [smem:[#allocation0]]
  $region18: #{tpu_custom_call.1} parent=0
    _
  %s4 = ssub.s32 1, %s2
  %s5 = scalar_select 0, %s4, %s2
  $region1: #{tpu_custom_call.1} parent=0
    #allocation2 [shape = 'u8[512]{0}', space=vmem, size = 0x400, scoped, tag = 'input window, operand 0, single buffered']
    #allocation3 [shape = 's32[1]{0}', space=sflag, size = 0x4, scoped, tag = 'scoped memory for tpu_custom_call.1']
    %6 = vsyncpa [#allocation3], 0
    // Predicated region
    $region2: #{tpu_custom_call.1} parent=1 // pred_check
      _
    $region3: #{tpu_custom_call.1} parent=1 // pred_check_branch
      %8 = sbr.rel (0) target = $region5
    $region4: #{tpu_custom_call.1} parent=1 // pred_region
      %10 = vsyncadd [#allocation3], 0
      %s12 = sshll.u32 %s0, 4
      %s13 = int_to_ptr.hbm [resolvable:$true] %s12
      %s14 = sshll.u32 [#allocation2], 4
      %s15 = int_to_ptr.vmem [resolvable:$true] %s14
      %17 = dma.hbm_to_vmem [thread:$0]  %s13, 16, %s15, [#allocation3]
    $region5: #{tpu_custom_call.1} parent=1 // pred_fallthru
      _
    // Predicated region
    $region6: #{tpu_custom_call.1} parent=1 // pred_check
      _
    $region7: #{tpu_custom_call.1} parent=1 // pred_check_branch
      %19 = sbr.rel (0) target = $region9
    $region8: #{tpu_custom_call.1} parent=1 // pred_region
      %21 = dma.done [#allocation3], 16
    $region9: #{tpu_custom_call.1} parent=1 // pred_fallthru
      _
    %s22 = smul.u32 0, 16
    %v23 = vlaneseq
    %v24 = vshrl.u32 %v23, 7
    %v25 = vadd.s32 %v24, 8
    %v26 = vstv %s22
    %v27 = vadd.s32 %v24, %v26
    %v28 = vadd.s32 %v25, %v26
    %v29 = vld [vmem:[#allocation2] sm:$0x1]
    %v30 = vperm.slane %v29, 0
    %vm31 = vcmp.gt.s32.totalorder %v30, %v27
    %vm32 = vcmp.gt.s32.totalorder %v30, %v28
    %v33 = vsel %vm31, 1, 0
    %v34 = vsel %vm32, 1, 0
    %vm35 = vcmask 130048
    %36 = vst.msk [vmem:[%s1] sm:$0xff] %vm35, %v33
    %37 = vst.msk [vmem:[%s1 + $0x8] sm:$0xff] %vm35, %v34
    // Predicated region
    $region10: #{tpu_custom_call.1} parent=1 // pred_check
      _
    $region11: #{tpu_custom_call.1} parent=1 // pred_check_branch
      %39 = sbr.rel (0) target = $region13
    $region12: #{tpu_custom_call.1} parent=1 // pred_region
      _
    $region13: #{tpu_custom_call.1} parent=1 // pred_fallthru
      _
    // Predicated region
    $region14: #{tpu_custom_call.1} parent=1 // pred_check
      _
    $region15: #{tpu_custom_call.1} parent=1 // pred_check_branch
      %41 = sbr.rel (0) target = $region17
    $region16: #{tpu_custom_call.1} parent=1 // pred_region
      _
    $region17: #{tpu_custom_call.1} parent=1 // pred_fallthru
      _
    %42 = vsyncpa [#allocation3], 1

</llo_original>
